<compile_context>
chip_gen: v6e
topology: v6e:2x2x1
jax: 0.10.0
libtpu: 0.0.40
codegen_flags: <defaults>
</compile_context>

<pallas_src>
import numpy as np
import jax
import jax.numpy as jnp
from jax import lax
from jax.experimental import pallas as pl
from jax.experimental.pallas import tpu as pltpu

KH = KW = 3
KK = KH * KW
PAD = 1
DIL = 1
STRIDE = 1
BN_EPS = 1e-5

LANE = 128            # TPU vreg lane width
SUBLANE_BF16 = 16     # bf16 sublane pack granule ((16, 128) minimum tile)


def _round_up(a, b):
    return -(-a // b) * b


# ----------------------------- Pallas kernel --------------------------------
def _dcn_bn_relu_kernel(cols_ref, w_ref, shift_ref, out_ref):
    # cols_ref : (K_pad, TP)    bf16 (mask-modulated deformable im2col, batch folded in lanes)
    # w_ref    : (C_pad, K_pad) bf16 (conv weight with BN scale folded in)
    # shift_ref: (C_pad, 1)     f32  (conv bias * scale + BN shift)
    # out_ref  : (C_pad, TP)    bf16
    acc = jnp.dot(w_ref[...], cols_ref[...],
                  preferred_element_type=jnp.float32)           # MXU, f32 accumulate
    y = jnp.maximum(acc + shift_ref[...], 0.0)                  # folded bias + BN, ReLU
    out_ref[...] = y.astype(out_ref.dtype)                      # bf16 writeback


# --------------- feature probe: single-buffered resident operands -----------
def _probe_buffered_one():
    """True iff pipeline_mode=pl.Buffered(1) compiles & runs correctly on this JAX/TPU."""
    try:
        def k(a_ref, b_ref, o_ref):
            o_ref[...] = a_ref[...] + b_ref[...]

        a = jnp.arange(8 * 256, dtype=jnp.float32).reshape(8, 256)
        b = jnp.full((8, 128), 3.0, jnp.float32)
        out = pl.pallas_call(
            k,
            out_shape=jax.ShapeDtypeStruct((8, 256), jnp.float32),
            grid_spec=pltpu.PrefetchScalarGridSpec(
                num_scalar_prefetch=0,
                grid=(2,),
                in_specs=[
                    pl.BlockSpec((8, 128), lambda t: (0, t)),
                    pl.BlockSpec((8, 128), lambda t: (0, 0),
                                 pipeline_mode=pl.Buffered(1)),
                ],
                out_specs=pl.BlockSpec((8, 128), lambda t: (0, t)),
            ),
        )(a, b)
        expected = a + jnp.concatenate([b, b], axis=1)
        return bool(jnp.allclose(jax.block_until_ready(out), expected))
    except Exception:
        return False


_BUFFERED_ONE_OK = _probe_buffered_one()


def _resident_spec(shape):
    """BlockSpec for a grid-invariant operand; single-buffered when supported."""
    index_map = lambda t: (0,) * len(shape)
    if _BUFFERED_ONE_OK:
        return pl.BlockSpec(shape, index_map, pipeline_mode=pl.Buffered(1))
    return pl.BlockSpec(shape, index_map)


# ------------------------ generation-aware tile planning --------------------
def _hw_plan():
    """(scoped-VMEM budget bytes, max lane-tile, small-VMEM generation?)."""
    try:
        vmem_cap = int(pltpu.get_tpu_info().vmem_capacity_bytes)
    except Exception:
        vmem_cap = 64 * 2 ** 20               # conservative (v7x-sized) fallback
    if vmem_cap >= 100 * 2 ** 20:             # v5e / v6e: 128 MiB physical VMEM
        return 96 * 2 ** 20, 8192, False
    return 44 * 2 ** 20, 2048, True           # v7x: 64 MiB per TensorCore


def _plan_tiles(k_pad, c_pad, lanes):
    """Pick lane tile TP (128-multiple), grid length, and scoped-VMEM limit."""
    budget, max_tp, small_vmem = _hw_plan()
    if small_vmem and k_pad >= 512 * KK:      # very deep C_in on v7x: cap the cols tile
        max_tp = min(max_tp, 1024)
    w_bufs = 1 if _BUFFERED_ONE_OK else 2
    fixed = c_pad * k_pad * 2 * w_bufs + c_pad * 4 * 2 + (2 << 20)   # weights+shift+scratch
    tp = max_tp
    while tp > LANE and fixed + 2 * 2 * tp * (k_pad + c_pad) > budget:
        tp -= LANE                            # cols + out tiles are double-buffered bf16
    tp = max(tp, LANE)
    tp = min(tp, _round_up(lanes, LANE))      # never larger than the (padded) problem
    if lanes > LANE:                          # keep >= 2 grid steps (v7x megacore)
        tp = min(tp, _round_up(pl.cdiv(lanes, 2), LANE))
    n_tiles = pl.cdiv(lanes, tp)
    return tp, n_tiles, budget


# ------------------------------- GEMM wrapper --------------------------------
def _deform_conv_core(cols, w_folded, shift):
    """cols: (K_pad, L) bf16; w_folded: (C_pad, K_pad) bf16; shift: (C_pad,) f32."""
    k_pad, lanes = cols.shape
    c_pad = w_folded.shape[0]

    tp, n_tiles, vmem_limit = _plan_tiles(k_pad, c_pad, lanes)
    l_pad = n_tiles * tp
    if l_pad != lanes:                        # zero-pad lane tail (sliced off later)
        cols = jnp.pad(cols, ((0, 0), (0, l_pad - lanes)))

    shift2 = shift.reshape(c_pad, 1).astype(jnp.float32)

    flops = 2 * c_pad * k_pad * l_pad
    bytes_accessed = (cols.size * cols.dtype.itemsize
                      + w_folded.size * w_folded.dtype.itemsize
                      + shift2.size * 4
                      + c_pad * l_pad * 2)    # bf16 output stream

    out = pl.pallas_call(
        _dcn_bn_relu_kernel,
        out_shape=jax.ShapeDtypeStruct((c_pad, l_pad), jnp.bfloat16),
        grid_spec=pltpu.PrefetchScalarGridSpec(
            num_scalar_prefetch=0,
            grid=(n_tiles,),
            in_specs=[
                pl.BlockSpec((k_pad, tp), lambda t: (0, t)),    # cols lane tile
                _resident_spec((c_pad, k_pad)),                 # weight (grid-invariant)
                _resident_spec((c_pad, 1)),                     # shift  (grid-invariant)
            ],
            out_specs=pl.BlockSpec((c_pad, tp), lambda t: (0, t)),
        ),
        compiler_params=pltpu.CompilerParams(
            dimension_semantics=("parallel",),                  # lane tiles independent
            vmem_limit_bytes=vmem_limit),
        cost_estimate=pl.CostEstimate(flops=flops, transcendentals=0,
                                      bytes_accessed=bytes_accessed),
    )(cols, w_folded, shift2)
    return out


# ------------------- deformable im2col (plain-JAX glue) ---------------------
# TODO(synk): the per-pixel bilinear gather is data-dependent indexing and stays in plain
# JAX (row-major gathers now, but still the end-to-end bottleneck at real resolutions);
# the long-term fix is to fuse it into the kernel per lane-tile via memory_space=pl.ANY +
# scalar-prefetched corner indices + manual make_async_copy double-buffering.
def _build_deform_cols(x, offset, mask, out_dtype=jnp.bfloat16):
    """Mask-modulated deformable im2col, returned as (C*KK, N*P) in out_dtype."""
    N, C, H, W = x.shape
    Ho, Wo = offset.shape[2], offset.shape[3]
    P = Ho * Wo

    hs = jnp.arange(Ho, dtype=jnp.float32) * STRIDE - PAD
    ws = jnp.arange(Wo, dtype=jnp.float32) * STRIDE - PAD
    ki = jnp.arange(KH, dtype=jnp.float32) * DIL
    kj = jnp.arange(KW, dtype=jnp.float32) * DIL
    base_h = jnp.broadcast_to(ki[:, None, None, None] + hs[None, None, :, None],
                              (KH, KW, Ho, Wo)).reshape(KK, Ho, Wo)
    base_w = jnp.broadcast_to(kj[None, :, None, None] + ws[None, None, None, :],
                              (KH, KW, Ho, Wo)).reshape(KK, Ho, Wo)

    # DCNv2 CUDA indexing: offset channel 2k = dy, 2k+1 = dx (offset = cat(o1, o2))
    dy = offset[:, 0::2]                                   # (N, KK, Ho, Wo)
    dx = offset[:, 1::2]
    h_im = base_h[None] + dy
    w_im = base_w[None] + dx

    valid = (h_im > -1.0) & (w_im > -1.0) & (h_im < H) & (w_im < W)

    h_low = jnp.floor(h_im)
    w_low = jnp.floor(w_im)
    lh = h_im - h_low
    lw = w_im - w_low
    hh = 1.0 - lh
    hw = 1.0 - lw

    h_low_i = h_low.astype(jnp.int32)
    w_low_i = w_low.astype(jnp.int32)
    h_high_i = h_low_i + 1
    w_high_i = w_low_i + 1

    # Row-major gather: rows of (H*W, C) are lane-contiguous -> row gathers, not lane gathers.
    x_rows = jnp.transpose(x, (0, 2, 3, 1)).reshape(N, H * W, C)

    def corner(hc, wc, wt, ok):
        hc_c = jnp.clip(hc, 0, H - 1)
        wc_c = jnp.clip(wc, 0, W - 1)
        idx = (hc_c * W + wc_c).reshape(N, KK * P)
        g = jax.vmap(lambda rows, ix: jnp.take(rows, ix, axis=0))(x_rows, idx)
        g = g.reshape(N, KK, P, C)
        wgt = (wt * ok.astype(jnp.float32)).reshape(N, KK, P, 1)
        return g * wgt

    ok1 = (h_low_i >= 0) & (w_low_i >= 0)
    ok2 = (h_low_i >= 0) & (w_high_i <= W - 1)
    ok3 = (h_high_i <= H - 1) & (w_low_i >= 0)
    ok4 = (h_high_i <= H - 1) & (w_high_i <= W - 1)

    val = (corner(h_low_i, w_low_i, hh * hw, ok1)
           + corner(h_low_i, w_high_i, hh * lw, ok2)
           + corner(h_high_i, w_low_i, lh * hw, ok3)
           + corner(h_high_i, w_high_i, lh * lw, ok4))
    val = val * valid.astype(jnp.float32).reshape(N, KK, P, 1)
    val = val * mask.reshape(N, KK, P, 1)          # DCNv2 modulation folded here

    # (N, KK, P, C) -> (C, KK, N, P) -> (C*KK, N*P): row index c*KK+kk matches weight reshape,
    # lane index n*P+p (batch folded into lanes for the kernel).
    cols = jnp.transpose(val, (3, 1, 0, 2)).reshape(C * KK, N * P)
    return cols.astype(out_dtype)


def _offset_mask(x, params):
    """conv_offset_mask: standard 3x3 conv producing 3*KK channels (plain JAX glue)."""
    om = lax.conv_general_dilated(
        x, params["w_off"], window_strides=(1, 1), padding=((PAD, PAD), (PAD, PAD)),
        dimension_numbers=("NCHW", "OIHW", "NCHW"))
    om = om + params["b_off"][None, :, None, None]
    o1 = om[:, :KK]
    o2 = om[:, KK:2 * KK]
    mask = jax.nn.sigmoid(om[:, 2 * KK:])
    offset = jnp.concatenate([o1, o2], axis=1)     # matches torch.cat((o1, o2), dim=1)
    return offset, mask


def _fold_bn_bias(params):
    """Fold BN scale into the conv weight and conv-bias+BN-shift into one vector."""
    C_out, C_in = params["w_dcn"].shape[0], params["w_dcn"].shape[1]
    w_mat = params["w_dcn"].reshape(C_out, C_in * KK).astype(jnp.float32)
    # TODO(synk): BatchNorm is inference-mode (running stats); training-mode batch
    # statistics are not computed in the kernel.
    scale = params["gamma"] / jnp.sqrt(params["running_var"] + BN_EPS)        # (C_out,)
    shift = params["beta"] - params["running_mean"] * scale                   # (C_out,)
    shift = shift + params["b_dcn"] * scale                                   # fold conv bias
    w_folded = (w_mat * scale[:, None]).astype(jnp.bfloat16)
    return w_folded, shift.astype(jnp.float32)


# ------------------------------ full forward ---------------------------------
def deform_conv_forward(x, params):
    """DeformConv.forward: DCN(3x3) -> BatchNorm2d (eval) -> ReLU. x is NCHW.

    Returns bf16 (the kernel writes bf16 to halve the output HBM stream; accumulation
    is f32 on the MXU)."""
    N, C, H, W = x.shape
    offset, mask = _offset_mask(x, params)
    cols = _build_deform_cols(x, offset, mask, out_dtype=jnp.bfloat16)   # (C*KK, N*P)

    w_folded, shift = _fold_bn_bias(params)
    C_out, K = w_folded.shape

    # pad C_out and K to the bf16 sublane granule so packed vregs / MXU passes are dense
    C_pad = _round_up(C_out, SUBLANE_BF16)
    K_pad = _round_up(K, SUBLANE_BF16)
    if C_pad != C_out or K_pad != K:
        w_folded = jnp.pad(w_folded, ((0, C_pad - C_out), (0, K_pad - K)))
        shift = jnp.pad(shift, ((0, C_pad - C_out),))
    if K_pad != K:
        cols = jnp.pad(cols, ((0, K_pad - K), (0, 0)))

    out = _deform_conv_core(cols, w_folded, shift)          # (C_pad, L_pad) bf16
    P = H * W
    out = out[:C_out, :N * P].reshape(C_out, N, P).transpose(1, 0, 2)
    return out.reshape(N, C_out, H, W)


# ------------------------------ references -----------------------------------
def _reference_forward_bf16(x, params):
    """Mirrors the kernel math exactly (bf16 operands/output, f32 accumulation), no Pallas."""
    N, C, H, W = x.shape
    offset, mask = _offset_mask(x, params)
    cols = _build_deform_cols(x, offset, mask, out_dtype=jnp.bfloat16)   # (C*KK, N*P)
    w_folded, shift = _fold_bn_bias(params)
    C_out = w_folded.shape[0]
    conv = jnp.dot(w_folded.astype(jnp.float32), cols.astype(jnp.float32))
    y = jnp.maximum(conv + shift[:, None], 0.0).astype(jnp.bfloat16)
    P = H * W
    return y.reshape(C_out, N, P).transpose(1, 0, 2).reshape(N, C_out, H, W)


def _reference_forward_f32(x, params):
    """Full f32 reference (original math, no folding / quantization)."""
    N, C, H, W = x.shape
    offset, mask = _offset_mask(x, params)
    cols = _build_deform_cols(x, offset, mask, out_dtype=jnp.float32)    # (C*KK, N*P)
    C_out = params["w_dcn"].shape[0]
    w_mat = params["w_dcn"].reshape(C_out, C * KK)
    conv = jnp.dot(w_mat, cols) + params["b_dcn"][:, None]
    scale = params["gamma"] / jnp.sqrt(params["running_var"] + BN_EPS)
    shift = params["beta"] - params["running_mean"] * scale
    y = jnp.maximum(conv * scale[:, None] + shift[:, None], 0.0)
    P = H * W
    return y.reshape(C_out, N, P).transpose(1, 0, 2).reshape(N, C_out, H, W)


# ---------------------------------- main -------------------------------------
if __name__ == "__main__":
    chi, cho = 4, 8
    N, H, W = 2, 16, 16

    key = jax.random.PRNGKey(0)
    ks = jax.random.split(key, 9)
    params = {
        # DCN main conv weight/bias (module __init__: (cho, chi, 3, 3), (cho,))
        "w_dcn": jax.random.normal(ks[0], (cho, chi, KH, KW), jnp.float32) * 0.1,
        "b_dcn": jax.random.normal(ks[1], (cho,), jnp.float32) * 0.1,
        # conv_offset_mask: (3*KK, chi, 3, 3). Real DCN zero-inits it; small random values
        # are used here so the deformable sampling path is actually exercised.
        "w_off": jax.random.normal(ks[2], (3 * KK, chi, KH, KW), jnp.float32) * 0.1,
        "b_off": jax.random.normal(ks[3], (3 * KK,), jnp.float32) * 0.1,
        # BatchNorm2d(cho) parameters / running stats
        "gamma": 1.0 + 0.1 * jax.random.normal(ks[4], (cho,), jnp.float32),
        "beta": 0.1 * jax.random.normal(ks[5], (cho,), jnp.float32),
        "running_mean": 0.1 * jax.random.normal(ks[6], (cho,), jnp.float32),
        "running_var": 1.0 + 0.1 * jnp.abs(jax.random.normal(ks[7], (cho,), jnp.float32)),
    }

    x = jax.random.normal(ks[8], (N, chi, H, W), jnp.float32)

    out = jax.block_until_ready(jax.jit(deform_conv_forward)(x, params))
    assert out.shape == (N, cho, H, W)
    out_f32 = np.asarray(out.astype(jnp.float32))

    # strict check vs a reference that mirrors the kernel's bf16 GEMM / f32 accumulate / bf16 out
    ref_bf16 = jax.block_until_ready(_reference_forward_bf16(x, params))
    np.testing.assert_allclose(out_f32, np.asarray(ref_bf16.astype(jnp.float32)),
                               rtol=2e-2, atol=2e-2)

    # loose sanity check vs the original full-f32 math (bounds bf16 quantization error)
    ref_f32 = jax.block_until_ready(_reference_forward_f32(x, params))
    np.testing.assert_allclose(out_f32, np.asarray(ref_f32), rtol=6e-2, atol=6e-2)

    print("KERNEL_OK")
</pallas_src>

<mosaic_0001>
module attributes {stable_mosaic.version = 11 : i64} {
  func.func @k(%arg0: i32, %arg1: memref<8x128xf32, #tpu.memory_space<vmem>>, %arg2: memref<8x128xf32, #tpu.memory_space<vmem>>, %arg3: memref<8x128xf32, #tpu.memory_space<vmem>>) attributes {dimension_semantics = [#tpu.dimension_semantics<arbitrary>], iteration_bounds = array<i64: 2>, scalar_prefetch = 0 : i64, scratch_operands = 0 : i64, tpu.core_type = #tpu.core_type<tc>, window_params = [{transform_indices = @transform_0, window_bounds = array<i64: 8, 128>}, {pipeline_mode = #tpu.pipeline_mode<synchronous>, transform_indices = @transform_1, window_bounds = array<i64: 8, 128>}, {transform_indices = @transform_2, window_bounds = array<i64: 8, 128>}]} {
    %c0 = arith.constant 0 : index
    %c0_0 = arith.constant 0 : index
    %0 = vector.load %arg1[%c0, %c0_0] : memref<8x128xf32, #tpu.memory_space<vmem>>, vector<8x128xf32>
    %c0_1 = arith.constant 0 : index
    %c0_2 = arith.constant 0 : index
    %1 = vector.load %arg2[%c0_1, %c0_2] : memref<8x128xf32, #tpu.memory_space<vmem>>, vector<8x128xf32>
    %2 = arith.addf %0, %1 : vector<8x128xf32>
    %c0_3 = arith.constant 0 : index
    %c0_4 = arith.constant 0 : index
    %3 = vector.load %arg3[%c0_3, %c0_4] : memref<8x128xf32, #tpu.memory_space<vmem>>, vector<8x128xf32>
    tpu.vector_store %arg3[%c0_3, %c0_4], %2 {strides = array<i32>} : memref<8x128xf32, #tpu.memory_space<vmem>>, vector<8x128xf32>,
    return
  }
  func.func @transform_0(%arg0: i32) -> (i32, i32) {
    %c0_i32 = arith.constant 0 : i32
    %c0_i32_0 = arith.constant 0 : i32
    return %c0_i32, %arg0 : i32, i32
  }
  func.func @transform_1(%arg0: i32) -> (i32, i32) {
    %c0_i32 = arith.constant 0 : i32
    %c0_i32_0 = arith.constant 0 : i32
    %c0_i32_1 = arith.constant 0 : i32
    return %c0_i32, %c0_i32_0 : i32, i32
  }
  func.func @transform_2(%arg0: i32) -> (i32, i32) {
    %c0_i32 = arith.constant 0 : i32
    %c0_i32_0 = arith.constant 0 : i32
    return %c0_i32, %arg0 : i32, i32
  }
}

module attributes {stable_mosaic.version = 11 : i64} {
  func.func @_dcn_bn_relu_kernel(%arg0: i32, %arg1: memref<48x256xbf16, #tpu.memory_space<vmem>>, %arg2: memref<16x48xbf16, #tpu.memory_space<vmem>>, %arg3: memref<16x1xf32, #tpu.memory_space<vmem>>, %arg4: memref<16x256xbf16, #tpu.memory_space<vmem>>) attributes {dimension_semantics = [#tpu.dimension_semantics<parallel>], iteration_bounds = array<i64: 2>, scalar_prefetch = 0 : i64, scratch_operands = 0 : i64, tpu.core_type = #tpu.core_type<tc>, window_params = [{transform_indices = @transform_0, window_bounds = array<i64: 48, 256>}, {pipeline_mode = #tpu.pipeline_mode<synchronous>, transform_indices = @transform_1, window_bounds = array<i64: 16, 48>}, {pipeline_mode = #tpu.pipeline_mode<synchronous>, transform_indices = @transform_2, window_bounds = array<i64: 16, 1>}, {transform_indices = @transform_3, window_bounds = array<i64: 16, 256>}]} {
    %c0 = arith.constant 0 : index
    %c0_0 = arith.constant 0 : index
    %0 = vector.load %arg2[%c0, %c0_0] : memref<16x48xbf16, #tpu.memory_space<vmem>>, vector<16x48xbf16>
    %c0_1 = arith.constant 0 : index
    %c0_2 = arith.constant 0 : index
    %1 = vector.load %arg1[%c0_1, %c0_2] : memref<48x256xbf16, #tpu.memory_space<vmem>>, vector<48x256xbf16>
    %cst = arith.constant dense<0.000000e+00> : vector<16x256xf32>
    %2 = tpu.matmul %0, %1, %cst {dimension_numbers = #tpu.dot_dimension_numbers<[1], [0], [0], [1], [0, 0, 1, 1], [], []>} : vector<16x48xbf16>, vector<48x256xbf16>, vector<16x256xf32> -> vector<16x256xf32>
    %c0_3 = arith.constant 0 : index
    %c0_4 = arith.constant 0 : index
    %3 = vector.load %arg3[%c0_3, %c0_4] : memref<16x1xf32, #tpu.memory_space<vmem>>, vector<16x1xf32>
    %4 = vector.broadcast %3 : vector<16x1xf32> to vector<16x256xf32>
    %5 = arith.addf %2, %4 : vector<16x256xf32>
    %cst_5 = arith.constant 0.000000e+00 : f32
    %6 = vector.broadcast %cst_5 : f32 to vector<16x256xf32>
    %7 = arith.maximumf %5, %6 : vector<16x256xf32>
    %8 = arith.truncf %7 : vector<16x256xf32> to vector<16x256xbf16>
    %c0_6 = arith.constant 0 : index
    %c0_7 = arith.constant 0 : index
    %9 = vector.load %arg4[%c0_6, %c0_7] : memref<16x256xbf16, #tpu.memory_space<vmem>>, vector<16x256xbf16>
    tpu.vector_store %arg4[%c0_6, %c0_7], %8 {strides = array<i32>} : memref<16x256xbf16, #tpu.memory_space<vmem>>, vector<16x256xbf16>,
    return
  }
  func.func @transform_0(%arg0: i32) -> (i32, i32) {
    %c0_i32 = arith.constant 0 : i32
    %c0_i32_0 = arith.constant 0 : i32
    return %c0_i32, %arg0 : i32, i32
  }
  func.func @transform_1(%arg0: i32) -> (i32, i32) {
    %c0_i32 = arith.constant 0 : i32
    %c0_i32_0 = arith.constant 0 : i32
    %c0_i32_1 = arith.constant 0 : i32
    return %c0_i32, %c0_i32_0 : i32, i32
  }
  func.func @transform_2(%arg0: i32) -> (i32, i32) {
    %c0_i32 = arith.constant 0 : i32
    %c0_i32_0 = arith.constant 0 : i32
    %c0_i32_1 = arith.constant 0 : i32
    return %c0_i32, %c0_i32_0 : i32, i32
  }
  func.func @transform_3(%arg0: i32) -> (i32, i32) {
    %c0_i32 = arith.constant 0 : i32
    %c0_i32_0 = arith.constant 0 : i32
    return %c0_i32, %arg0 : i32, i32
  }
}

</mosaic_0001>

<llo_original>
// kernel: tpu_custom_call.1
$region0: #{tpu_custom_call.1}
  #allocation0 [shape = 'u32[]', space=smem, size = 0x4, offset = 0x4, fixed_abs, tag = 'smem constant byte address 0x4 - core index']
  #allocation1 [shape = 'u32[144,128]{1,0:T(1,128)}', space=vmem, size = 0x12000, scoped, tag = 'internal scratch']
  %s0 = inlined_call_operand.hbm [shape: f32[8,256], index: 0, kind: input, shape index: {}]
  %s1 = inlined_call_operand.hbm [shape: f32[8,128], index: 1, kind: input, shape index: {}]
  %s2 = inlined_call_operand.hbm [shape: f32[8,256], index: 2, kind: output, shape index: {}]
  %s3 = sld [smem:[#allocation0]]
  $region49: #{tpu_custom_call.1} parent=0
    _
  %s5 = ssub.s32 1, %s3
  %s6 = scalar_select 0, %s5, %s3
  $region1: #{tpu_custom_call.1} parent=0
    #allocation2 [shape = 'u8[8192]{0}', space=vmem, size = 0x2000, scoped, tag = 'input window, operand 0']
    #allocation3 [shape = 's32[2]{0}', space=sflag, size = 0x8, scoped, tag = 'scoped memory for tpu_custom_call.1']
    #allocation4 [shape = 's32[2]{0}', space=sflag, size = 0x8, scoped, tag = 'scoped memory for tpu_custom_call.1']
    #allocation5 [shape = 'u8[4096]{0}', space=vmem, size = 0x1000, scoped, tag = 'input window, operand 1, single buffered']
    #allocation6 [shape = 's32[1]{0}', space=sflag, size = 0x4, scoped, tag = 'scoped memory for tpu_custom_call.1']
    #allocation7 [shape = 'u8[8192]{0}', space=vmem, size = 0x2000, scoped, tag = 'output window, operand 0']
    %7 = vsyncpa [#allocation3], 0
    %s8 = scalar_lea.sflag [#allocation3], 1
    %9 = vsyncpa %s8, 0
    %10 = vsyncpa [#allocation6], 0
    %11 = vsyncpa [#allocation4], 0
    %s12 = scalar_lea.sflag [#allocation4], 1
    %13 = vsyncpa %s12, 0
    loop: start=0, step=1, limit=4
    $region2: #{tpu_custom_call.1} parent=1 // loop_pre_header
      _
    $region3: #{tpu_custom_call.1} parent=1 // loop_header
      %s15 = sphi 0, %s19
      %p16 = scmp.ge.s32.totalorder %s15, 4
      %s25 = sphi 0, %s27
      %s28 = sphi 0, %s25
      %s29 = sphi 0, %s28
      %s45 = sphi 0, %s29
      %s49 = sphi 0, %s49
      %s51 = sphi 0, %s49
      %s52 = sphi 0, %s51
      %s66 = sphi 0, %s52
      %s72 = sphi 0, %s74
      %s75 = sphi 0, %s72
      %s76 = sphi 0, %s75
      %s92 = sphi 0, %s76
    $region4: #{tpu_custom_call.1} parent=1 // loop_header_branch
      %18 = sbr.rel (%p16) target = $region8
    $region5: #{tpu_custom_call.1} parent=1 // loop_body
      %s20 = ssub.s32 %s15, 1
      %s21 = ssub.s32 %s15, 2
      %s22 = sadd.s32 %s15, 1
      %s23 = ssub.s32 %s15, %s22
      %p24 = scmp.eq.s32.totalorder %s23, 0
      %s26 = sadd.s32 %s25, 1
      %s27 = scalar_select %p24, %s25, %s26
      %p30 = pneg %p24
      %p31 = scmp.eq.s32.totalorder %s15, 1
      %p32 = por %p30, %p31
      %p33 = scmp.ne.s32.totalorder %s25, %s28
      %p34 = scmp.eq.s32.totalorder %s15, 0
      %p35 = por %p33, %p34
      %p36 = scmp.ne.s32.totalorder %s25, %s28
      %p37 = scmp.eq.s32.totalorder %s20, 1
      %p38 = por %p36, %p37
      %p39 = scmp.ne.s32.totalorder %s28, %s29
      %p40 = scmp.eq.s32.totalorder %s20, 0
      %p41 = por %p39, %p40
      %p42 = scmp.ne.s32.totalorder %s28, %s29
      %p43 = scmp.eq.s32.totalorder %s21, 1
      %p44 = por %p42, %p43
      %p46 = scmp.ne.s32.totalorder %s29, %s45
      %p47 = scmp.eq.s32.totalorder %s21, 0
      %p48 = por %p46, %p47
      %s50 = sadd.s32 %s49, 1
      %p53 = scmp.eq.s32.totalorder %s15, 1
      %p54 = scmp.ne.s32.totalorder %s49, %s51
      %p55 = scmp.eq.s32.totalorder %s15, 0
      %p56 = por %p54, %p55
      %p57 = scmp.ne.s32.totalorder %s49, %s51
      %p58 = scmp.eq.s32.totalorder %s20, 1
      %p59 = por %p57, %p58
      %p60 = scmp.ne.s32.totalorder %s51, %s52
      %p61 = scmp.eq.s32.totalorder %s20, 0
      %p62 = por %p60, %p61
      %p63 = scmp.ne.s32.totalorder %s51, %s52
      %p64 = scmp.eq.s32.totalorder %s21, 1
      %p65 = por %p63, %p64
      %p67 = scmp.ne.s32.totalorder %s52, %s66
      %p68 = scmp.eq.s32.totalorder %s21, 0
      %p69 = por %p67, %p68
      %s70 = ssub.s32 %s15, %s22
      %p71 = scmp.eq.s32.totalorder %s70, 0
      %s73 = sadd.s32 %s72, 1
      %s74 = scalar_select %p71, %s72, %s73
      %p77 = pneg %p71
      %p78 = scmp.eq.s32.totalorder %s15, 1
      %p79 = por %p77, %p78
      %p80 = scmp.ne.s32.totalorder %s72, %s75
      %p81 = scmp.eq.s32.totalorder %s15, 0
      %p82 = por %p80, %p81
      %p83 = scmp.ne.s32.totalorder %s72, %s75
      %p84 = scmp.eq.s32.totalorder %s20, 1
      %p85 = por %p83, %p84
      %p86 = scmp.ne.s32.totalorder %s75, %s76
      %p87 = scmp.eq.s32.totalorder %s20, 0
      %p88 = por %p86, %p87
      %p89 = scmp.ne.s32.totalorder %s75, %s76
      %p90 = scmp.eq.s32.totalorder %s21, 1
      %p91 = por %p89, %p90
      %p93 = scmp.ne.s32.totalorder %s76, %s92
      %p94 = scmp.eq.s32.totalorder %s21, 0
      %p95 = por %p93, %p94
      %p96 = scmp.le.s32.totalorder 1, %s15
      %p97 = scmp.lt.s32.totalorder %s15, 3
      %p98 = pnand %p96, %p97
      %p99 = pneg %p98
      // Predicated region
      $region9: #{tpu_custom_call.1} parent=5 // pred_check
        _
      $region10: #{tpu_custom_call.1} parent=5 // pred_check_branch
        %101 = sbr.rel (%p98) target = $region12
      $region11: #{tpu_custom_call.1} parent=5 // pred_region
        %s102 = ssub.s32 %s15, 1
        // Predicated region
        $region13: #{tpu_custom_call.1} parent=11 // pred_check
          %p103 = pneg %p62
        $region14: #{tpu_custom_call.1} parent=11 // pred_check_branch
          %105 = sbr.rel (%p103) target = $region16
        $region15: #{tpu_custom_call.1} parent=11 // pred_region
          %s107 = ssub.s32 128, 128
          %108 = vsyncadd [#allocation6], %s107
          %s110 = sshll.u32 [#allocation5], 4
          %s111 = int_to_ptr.vmem [resolvable:$true] %s110
          %113 = dma.hbm_to_vmem [thread:$0]  %s1, 128, %s111, [#allocation6]
        $region16: #{tpu_custom_call.1} parent=11 // pred_fallthru
          _
      $region12: #{tpu_custom_call.1} parent=5 // pred_fallthru
        _
      %p114 = scmp.lt.s32.totalorder %s15, 2
      // Predicated region
      $region17: #{tpu_custom_call.1} parent=5 // pred_check
        %p115 = pneg %p114
      $region18: #{tpu_custom_call.1} parent=5 // pred_check_branch
        %117 = sbr.rel (%p115) target = $region20
      $region19: #{tpu_custom_call.1} parent=5 // pred_region
        // Predicated region
        $region21: #{tpu_custom_call.1} parent=19 // pred_check
          %p118 = pneg %p35
        $region22: #{tpu_custom_call.1} parent=19 // pred_check_branch
          %120 = sbr.rel (%p118) target = $region24
        $region23: #{tpu_custom_call.1} parent=19 // pred_region
          %s121 = sand.u32 %s25, 1
          %s122 = scalar_lea.sflag [#allocation3], %s121
          %s123 = sand.u32 %s25, 1
          %s124 = smul.addr %s123, 8
          %s125 = scalar_lea.vmem [#allocation2], %s124
          %s127 = ssub.s32 128, 128
          %128 = vsyncadd %s122, %s127
          %s129 = smul.addr %s15, 128
          %s130 = scalar_lea.hbm %s0, %s129
          %s132 = sshll.u32 %s125, 4
          %s133 = int_to_ptr.vmem [resolvable:$true] %s132
          %135 = dma.hbm_to_vmem [thread:$0]  %s130, 128, %s133, %s122
        $region24: #{tpu_custom_call.1} parent=19 // pred_fallthru
          _
      $region20: #{tpu_custom_call.1} parent=5 // pred_fallthru
        _
      %p136 = scmp.le.s32.totalorder 1, %s15
      %p137 = scmp.lt.s32.totalorder %s15, 3
      %p138 = pnand %p136, %p137
      %p139 = pneg %p138
      // Predicated region
      $region25: #{tpu_custom_call.1} parent=5 // pred_check
        _
      $region26: #{tpu_custom_call.1} parent=5 // pred_check_branch
        %141 = sbr.rel (%p138) target = $region28
      $region27: #{tpu_custom_call.1} parent=5 // pred_region
        %s142 = ssub.s32 %s15, 1
        %s143 = sand.u32 %s28, 1
        %s144 = scalar_lea.sflag [#allocation3], %s143
        %s145 = sand.u32 %s28, 1
        %s146 = smul.addr %s145, 8
        %s147 = scalar_lea.vmem [#allocation2], %s146
        // Predicated region
        $region29: #{tpu_custom_call.1} parent=27 // pred_check
          %p148 = pneg %p41
        $region30: #{tpu_custom_call.1} parent=27 // pred_check_branch
          %150 = sbr.rel (%p148) target = $region32
        $region31: #{tpu_custom_call.1} parent=27 // pred_region
          %151 = dma.done %s144, 128
        $region32: #{tpu_custom_call.1} parent=27 // pred_fallthru
          _
        // Predicated region
        $region33: #{tpu_custom_call.1} parent=27 // pred_check
          %p152 = pneg %p62
        $region34: #{tpu_custom_call.1} parent=27 // pred_check_branch
          %154 = sbr.rel (%p152) target = $region36
        $region35: #{tpu_custom_call.1} parent=27 // pred_region
          %155 = dma.done [#allocation6], 128
        $region36: #{tpu_custom_call.1} parent=27 // pred_fallthru
          _
        %s156 = sand.u32 %s28, 1
        %s157 = scalar_lea.sflag [#allocation3], %s156
        %s158 = sand.u32 %s28, 1
        %s159 = smul.addr %s158, 8
        %s160 = scalar_lea.vmem [#allocation2], %s159
        %p161 = pneg %p41
        %p162 = pneg %p38
        %p163 = pneg %p62
        %p164 = pneg %p59
        %p165 = pneg %p88
        %p166 = pneg %p85
        %s167 = sand.u32 %s75, 1
        %s168 = scalar_lea.sflag [#allocation4], %s167
        %s169 = sand.u32 %s75, 1
        %s170 = smul.addr %s169, 8
        %s171 = scalar_lea.vmem [#allocation7], %s170
        %v172 = vld [vmem:[%s147] sm:$0xff]
        %v173 = vld [vmem:[#allocation5] sm:$0xff]
        %v174 = vadd.f32 %v172, %v173
        %175 = vst [vmem:[%s171] sm:$0xff] %v174
        %s176 = sand.u32 %s75, 1
        %s177 = scalar_lea.sflag [#allocation4], %s176
        %s178 = sand.u32 %s75, 1
        %s179 = smul.addr %s178, 8
        %s180 = scalar_lea.vmem [#allocation7], %s179
        // Predicated region
        $region37: #{tpu_custom_call.1} parent=27 // pred_check
          %p181 = pneg %p85
        $region38: #{tpu_custom_call.1} parent=27 // pred_check_branch
          %183 = sbr.rel (%p181) target = $region40
        $region39: #{tpu_custom_call.1} parent=27 // pred_region
          %s185 = ssub.s32 128, 128
          %186 = vsyncadd %s177, %s185
          %s187 = smul.addr %s20, 128
          %s188 = scalar_lea.hbm %s2, %s187
          %s190 = sshll.u32 %s180, 4
          %s191 = int_to_ptr.vmem [resolvable:$true] %s190
          %193 = dma.vmem_to_hbm [thread:$0]  %s191, 128, %s188, %s177
        $region40: #{tpu_custom_call.1} parent=27 // pred_fallthru
          _
      $region28: #{tpu_custom_call.1} parent=5 // pred_fallthru
        _
      %p194 = scmp.le.s32.totalorder 2, %s15
      // Predicated region
      $region41: #{tpu_custom_call.1} parent=5 // pred_check
        %p195 = pneg %p194
      $region42: #{tpu_custom_call.1} parent=5 // pred_check_branch
        %197 = sbr.rel (%p195) target = $region44
      $region43: #{tpu_custom_call.1} parent=5 // pred_region
        %s198 = ssub.s32 %s15, 2
        // Predicated region
        $region45: #{tpu_custom_call.1} parent=43 // pred_check
          %p199 = pneg %p91
        $region46: #{tpu_custom_call.1} parent=43 // pred_check_branch
          %201 = sbr.rel (%p199) target = $region48
        $region47: #{tpu_custom_call.1} parent=43 // pred_region
          %s202 = sand.u32 %s76, 1
          %s203 = scalar_lea.sflag [#allocation4], %s202
          %s204 = sand.u32 %s76, 1
          %s205 = smul.addr %s204, 8
          %s206 = scalar_lea.vmem [#allocation7], %s205
          %207 = dma.done %s203, 128
        $region48: #{tpu_custom_call.1} parent=43 // pred_fallthru
          _
      $region44: #{tpu_custom_call.1} parent=5 // pred_fallthru
        _
    $region6: #{tpu_custom_call.1} parent=1 // loop_footer
      %s19 = sadd.s32 1, %s15
    $region7: #{tpu_custom_call.1} parent=1 // loop_footer_branch
      %14 = sbr.rel target = $region3
    $region8: #{tpu_custom_call.1} parent=1 // loop_exit
      _
    %208 = vsyncpa [#allocation3], 1
    %s209 = scalar_lea.sflag [#allocation3], 1
    %210 = vsyncpa %s209, 1
    %211 = vsyncpa [#allocation6], 1
    %212 = vsyncpa [#allocation4], 1
    %s213 = scalar_lea.sflag [#allocation4], 1
    %214 = vsyncpa %s213, 1

// kernel: deform_conv_forward.1
$region0: #{deform_conv_forward.1}
  #allocation0 [shape = 'u32[]', space=smem, size = 0x4, offset = 0x4, fixed_abs, tag = 'smem constant byte address 0x4 - core index']
  #allocation1 [shape = 'u32[144,128]{1,0:T(1,128)}', space=vmem, size = 0x12000, scoped, tag = 'internal scratch']
  %s0 = inlined_call_operand.vmem [shape: bf16[48,512], index: 0, kind: input, shape index: {}]
  %s1 = inlined_call_operand.vmem [shape: bf16[16,48], index: 1, kind: input, shape index: {}]
  %s2 = inlined_call_operand.vmem [shape: f32[16,1], index: 2, kind: input, shape index: {}]
  %s3 = inlined_call_operand.vmem [shape: bf16[16,512], index: 3, kind: output, shape index: {}]
  %s4 = sld [smem:[#allocation0]]
  $region117: #{deform_conv_forward.1} parent=0
    _
  %s6 = ssub.s32 1, %s4
  %s7 = scalar_select 0, %s6, %s4
  $region1: #{deform_conv_forward.1} parent=0
    #allocation2 [shape = 'u8[49152]{0}', space=vmem, size = 0xc000, scoped, tag = 'input window, operand 0']
    #allocation3 [shape = 'u8[16384]{0}', space=vmem, size = 0x4000, scoped, tag = 'output window, operand 0']
    loop: start=0, step=1, limit=4
    $region2: #{deform_conv_forward.1} parent=1 // loop_pre_header
      _
    $region3: #{deform_conv_forward.1} parent=1 // loop_header
      %s9 = sphi 0, %s13
      %p10 = scmp.ge.s32.totalorder %s9, 4
      %s19 = sphi 0, %s21
      %s22 = sphi 0, %s19
      %s23 = sphi 0, %s22
      %s39 = sphi 0, %s23
      %s43 = sphi 0, %s43
      %s45 = sphi 0, %s43
      %s46 = sphi 0, %s45
      %s60 = sphi 0, %s46
      %s64 = sphi 0, %s64
      %s66 = sphi 0, %s64
      %s67 = sphi 0, %s66
      %s81 = sphi 0, %s67
      %s87 = sphi 0, %s89
      %s90 = sphi 0, %s87
      %s91 = sphi 0, %s90
      %s107 = sphi 0, %s91
    $region4: #{deform_conv_forward.1} parent=1 // loop_header_branch
      %12 = sbr.rel (%p10) target = $region8
    $region5: #{deform_conv_forward.1} parent=1 // loop_body
      %s14 = ssub.s32 %s9, 1
      %s15 = ssub.s32 %s9, 2
      %s16 = sadd.s32 %s9, 1
      %s17 = ssub.s32 %s9, %s16
      %p18 = scmp.eq.s32.totalorder %s17, 0
      %s20 = sadd.s32 %s19, 1
      %s21 = scalar_select %p18, %s19, %s20
      %p24 = pneg %p18
      %p25 = scmp.eq.s32.totalorder %s9, 1
      %p26 = por %p24, %p25
      %p27 = scmp.ne.s32.totalorder %s19, %s22
      %p28 = scmp.eq.s32.totalorder %s9, 0
      %p29 = por %p27, %p28
      %p30 = scmp.ne.s32.totalorder %s19, %s22
      %p31 = scmp.eq.s32.totalorder %s14, 1
      %p32 = por %p30, %p31
      %p33 = scmp.ne.s32.totalorder %s22, %s23
      %p34 = scmp.eq.s32.totalorder %s14, 0
      %p35 = por %p33, %p34
      %p36 = scmp.ne.s32.totalorder %s22, %s23
      %p37 = scmp.eq.s32.totalorder %s15, 1
      %p38 = por %p36, %p37
      %p40 = scmp.ne.s32.totalorder %s23, %s39
      %p41 = scmp.eq.s32.totalorder %s15, 0
      %p42 = por %p40, %p41
      %s44 = sadd.s32 %s43, 1
      %p47 = scmp.eq.s32.totalorder %s9, 1
      %p48 = scmp.ne.s32.totalorder %s43, %s45
      %p49 = scmp.eq.s32.totalorder %s9, 0
      %p50 = por %p48, %p49
      %p51 = scmp.ne.s32.totalorder %s43, %s45
      %p52 = scmp.eq.s32.totalorder %s14, 1
      %p53 = por %p51, %p52
      %p54 = scmp.ne.s32.totalorder %s45, %s46
      %p55 = scmp.eq.s32.totalorder %s14, 0
      %p56 = por %p54, %p55
      %p57 = scmp.ne.s32.totalorder %s45, %s46
      %p58 = scmp.eq.s32.totalorder %s15, 1
      %p59 = por %p57, %p58
      %p61 = scmp.ne.s32.totalorder %s46, %s60
      %p62 = scmp.eq.s32.totalorder %s15, 0
      %p63 = por %p61, %p62
      %s65 = sadd.s32 %s64, 1
      %p68 = scmp.eq.s32.totalorder %s9, 1
      %p69 = scmp.ne.s32.totalorder %s64, %s66
      %p70 = scmp.eq.s32.totalorder %s9, 0
      %p71 = por %p69, %p70
      %p72 = scmp.ne.s32.totalorder %s64, %s66
      %p73 = scmp.eq.s32.totalorder %s14, 1
      %p74 = por %p72, %p73
      %p75 = scmp.ne.s32.totalorder %s66, %s67
      %p76 = scmp.eq.s32.totalorder %s14, 0
      %p77 = por %p75, %p76
      %p78 = scmp.ne.s32.totalorder %s66, %s67
      %p79 = scmp.eq.s32.totalorder %s15, 1
      %p80 = por %p78, %p79
      %p82 = scmp.ne.s32.totalorder %s67, %s81
      %p83 = scmp.eq.s32.totalorder %s15, 0
      %p84 = por %p82, %p83
      %s85 = ssub.s32 %s9, %s16
      %p86 = scmp.eq.s32.totalorder %s85, 0
      %s88 = sadd.s32 %s87, 1
      %s89 = scalar_select %p86, %s87, %s88
      %p92 = pneg %p86
      %p93 = scmp.eq.s32.totalorder %s9, 1
      %p94 = por %p92, %p93
      %p95 = scmp.ne.s32.totalorder %s87, %s90
      %p96 = scmp.eq.s32.totalorder %s9, 0
      %p97 = por %p95, %p96
      %p98 = scmp.ne.s32.totalorder %s87, %s90
      %p99 = scmp.eq.s32.totalorder %s14, 1
      %p100 = por %p98, %p99
      %p101 = scmp.ne.s32.totalorder %s90, %s91
      %p102 = scmp.eq.s32.totalorder %s14, 0
      %p103 = por %p101, %p102
      %p104 = scmp.ne.s32.totalorder %s90, %s91
      %p105 = scmp.eq.s32.totalorder %s15, 1
      %p106 = por %p104, %p105
      %p108 = scmp.ne.s32.totalorder %s91, %s107
      %p109 = scmp.eq.s32.totalorder %s15, 0
      %p110 = por %p108, %p109
      %p111 = scmp.le.s32.totalorder 1, %s9
      %p112 = scmp.lt.s32.totalorder %s9, 3
      %p113 = pnand %p111, %p112
      %p114 = pneg %p113
      // Predicated region
      $region9: #{deform_conv_forward.1} parent=5 // pred_check
        _
      $region10: #{deform_conv_forward.1} parent=5 // pred_check_branch
        %116 = sbr.rel (%p113) target = $region12
      $region11: #{deform_conv_forward.1} parent=5 // pred_region
        %s117 = ssub.s32 %s9, 1
        // Predicated region
        $region13: #{deform_conv_forward.1} parent=11 // pred_check
          %p118 = pneg %p56
        $region14: #{deform_conv_forward.1} parent=11 // pred_check_branch
          %120 = sbr.rel (%p118) target = $region16
        $region15: #{deform_conv_forward.1} parent=11 // pred_region
          _
        $region16: #{deform_conv_forward.1} parent=11 // pred_fallthru
          _
        // Predicated region
        $region17: #{deform_conv_forward.1} parent=11 // pred_check
          %p121 = pneg %p77
        $region18: #{deform_conv_forward.1} parent=11 // pred_check_branch
          %123 = sbr.rel (%p121) target = $region20
        $region19: #{deform_conv_forward.1} parent=11 // pred_region
          _
        $region20: #{deform_conv_forward.1} parent=11 // pred_fallthru
          _
      $region12: #{deform_conv_forward.1} parent=5 // pred_fallthru
        _
      %p124 = scmp.lt.s32.totalorder %s9, 2
      // Predicated region
      $region21: #{deform_conv_forward.1} parent=5 // pred_check
        %p125 = pneg %p124
      $region22: #{deform_conv_forward.1} parent=5 // pred_check_branch
        %127 = sbr.rel (%p125) target = $region24
      $region23: #{deform_conv_forward.1} parent=5 // pred_region
        // Predicated region
        $region25: #{deform_conv_forward.1} parent=23 // pred_check
          %p128 = pneg %p29
        $region26: #{deform_conv_forward.1} parent=23 // pred_check_branch
          %130 = sbr.rel (%p128) target = $region28
        $region27: #{deform_conv_forward.1} parent=23 // pred_region
          %s131 = sand.u32 %s19, 1
          %s132 = sand.u32 %s19, 1
          %s133 = smul.addr %s132, 48
          %s134 = scalar_lea.vmem [#allocation2], %s133
          %s135 = smul.u32 2, %s9
          %s136 = smul.addr %s135, 4
          %s137 = scalar_lea.vmem %s0, %s136
          // Predicated region
          $region29: #{deform_conv_forward.1} parent=27 // pred_check
            _
          $region30: #{deform_conv_forward.1} parent=27 // pred_check_branch
            %139 = sbr.rel (0) target = $region32
          $region31: #{deform_conv_forward.1} parent=27 // pred_region
            // Predicated region
            $region33: #{deform_conv_forward.1} parent=31 // pred_check
              _
            $region34: #{deform_conv_forward.1} parent=31 // pred_check_branch
              %141 = sbr.rel (0) target = $region36
            $region35: #{deform_conv_forward.1} parent=31 // pred_region
              // Predicated region
              $region48: #{deform_conv_forward.1} parent=35 // pred_check
                _
              $region49: #{deform_conv_forward.1} parent=35 // pred_check_branch
                %167 = sbr.rel (0) target = $region51
              $region50: #{deform_conv_forward.1} parent=35 // pred_region
                loop: start=0, step=1, limit=1
                $region52: #{deform_conv_forward.1} parent=50 // loop_pre_header
                  _
                $region53: #{deform_conv_forward.1} parent=50 // loop_header
                  %s169 = sphi 0, %s173
                  %p170 = scmp.ge.s32.totalorder %s169, 1
                  %s174 = sphi %s137, %s137
                  %s175 = sphi %s134, %s134
                $region54: #{deform_conv_forward.1} parent=50 // loop_header_branch
                  %172 = sbr.rel (%p170) target = $region58
                $region55: #{deform_conv_forward.1} parent=50 // loop_body
                  %v176 = vld [vmem:[%s174] sm:$0xff]
                  %177 = vst [vmem:[%s175] sm:$0xff] %v176
                  %v178 = vld [vmem:[%s174 + $0x10] sm:$0xff]
                  %179 = vst [vmem:[%s175 + $0x8] sm:$0xff] %v178
                  %v180 = vld [vmem:[%s174 + $0x20] sm:$0xff]
                  %181 = vst [vmem:[%s175 + $0x10] sm:$0xff] %v180
                  %v182 = vld [vmem:[%s174 + $0x30] sm:$0xff]
                  %183 = vst [vmem:[%s175 + $0x18] sm:$0xff] %v182
                  %v184 = vld [vmem:[%s174 + $0x40] sm:$0xff]
                  %185 = vst [vmem:[%s175 + $0x20] sm:$0xff] %v184
                  %v186 = vld [vmem:[%s174 + $0x50] sm:$0xff]
                  %187 = vst [vmem:[%s175 + $0x28] sm:$0xff] %v186
                $region56: #{deform_conv_forward.1} parent=50 // loop_footer
                  %s173 = sadd.s32 1, %s169
                $region57: #{deform_conv_forward.1} parent=50 // loop_footer_branch
                  %168 = sbr.rel target = $region53
                $region58: #{deform_conv_forward.1} parent=50 // loop_exit
                  _
              $region51: #{deform_conv_forward.1} parent=35 // pred_fallthru
                _
              // Predicated region
              $region59: #{deform_conv_forward.1} parent=35 // pred_check
                _
              $region60: #{deform_conv_forward.1} parent=35 // pred_check_branch
                %189 = sbr.rel target = $region62
              $region61: #{deform_conv_forward.1} parent=35 // pred_region
                _
              $region62: #{deform_conv_forward.1} parent=35 // pred_fallthru
                _
            $region36: #{deform_conv_forward.1} parent=31 // pred_fallthru
              _
            // Predicated region
            $region37: #{deform_conv_forward.1} parent=31 // pred_check
              _
            $region38: #{deform_conv_forward.1} parent=31 // pred_check_branch
              %143 = sbr.rel target = $region40
            $region39: #{deform_conv_forward.1} parent=31 // pred_region
              %s145 = ssub.s32 256, 1
              loop: start=0, step=1, limit=1
              $region41: #{deform_conv_forward.1} parent=39 // loop_pre_header
                _
              $region42: #{deform_conv_forward.1} parent=39 // loop_header
                %s147 = sphi 0, %s151
                %p148 = scmp.ge.s32.totalorder %s147, 1
                %s152 = sphi %s137, %s137
                %s153 = sphi %s134, %s134
              $region43: #{deform_conv_forward.1} parent=39 // loop_header_branch
                %150 = sbr.rel (%p148) target = $region47
              $region44: #{deform_conv_forward.1} parent=39 // loop_body
                %v154 = vld [vmem:[%s152] sm:%s145]
                %155 = vst [vmem:[%s153] sm:%s145] %v154
                %v156 = vld [vmem:[%s152 + $0x10] sm:%s145]
                %157 = vst [vmem:[%s153 + $0x8] sm:%s145] %v156
                %v158 = vld [vmem:[%s152 + $0x20] sm:%s145]
                %159 = vst [vmem:[%s153 + $0x10] sm:%s145] %v158
                %v160 = vld [vmem:[%s152 + $0x30] sm:%s145]
                %161 = vst [vmem:[%s153 + $0x18] sm:%s145] %v160
                %v162 = vld [vmem:[%s152 + $0x40] sm:%s145]
                %163 = vst [vmem:[%s153 + $0x20] sm:%s145] %v162
                %v164 = vld [vmem:[%s152 + $0x50] sm:%s145]
                %165 = vst [vmem:[%s153 + $0x28] sm:%s145] %v164
              $region45: #{deform_conv_forward.1} parent=39 // loop_footer
                %s151 = sadd.s32 1, %s147
              $region46: #{deform_conv_forward.1} parent=39 // loop_footer_branch
                %146 = sbr.rel target = $region42
              $region47: #{deform_conv_forward.1} parent=39 // loop_exit
                _
            $region40: #{deform_conv_forward.1} parent=31 // pred_fallthru
              _
          $region32: #{deform_conv_forward.1} parent=27 // pred_fallthru
            _
          %190 = vnop
        $region28: #{deform_conv_forward.1} parent=23 // pred_fallthru
          _
      $region24: #{deform_conv_forward.1} parent=5 // pred_fallthru
        _
      %p191 = scmp.le.s32.totalorder 1, %s9
      %p192 = scmp.lt.s32.totalorder %s9, 3
      %p193 = pnand %p191, %p192
      %p194 = pneg %p193
      // Predicated region
      $region63: #{deform_conv_forward.1} parent=5 // pred_check
        _
      $region64: #{deform_conv_forward.1} parent=5 // pred_check_branch
        %196 = sbr.rel (%p193) target = $region66
      $region65: #{deform_conv_forward.1} parent=5 // pred_region
        %s197 = ssub.s32 %s9, 1
        %s198 = sand.u32 %s22, 1
        %s199 = sand.u32 %s22, 1
        %s200 = smul.addr %s199, 48
        %s201 = scalar_lea.vmem [#allocation2], %s200
        // Predicated region
        $region67: #{deform_conv_forward.1} parent=65 // pred_check
          %p202 = pneg %p35
        $region68: #{deform_conv_forward.1} parent=65 // pred_check_branch
          %204 = sbr.rel (%p202) target = $region70
        $region69: #{deform_conv_forward.1} parent=65 // pred_region
          _
        $region70: #{deform_conv_forward.1} parent=65 // pred_fallthru
          _
        %s205 = sand.u32 %s22, 1
        %s206 = sand.u32 %s22, 1
        %s207 = smul.addr %s206, 48
        %s208 = scalar_lea.vmem [#allocation2], %s207
        %p209 = pneg %p35
        %p210 = pneg %p32
        %p211 = pneg %p56
        %p212 = pneg %p53
        %p213 = pneg %p77
        %p214 = pneg %p74
        %p215 = pneg %p103
        %p216 = pneg %p100
        %s217 = sand.u32 %s90, 1
        %s218 = sand.u32 %s90, 1
        %s219 = smul.addr %s218, 16
        %s220 = scalar_lea.vmem [#allocation3], %s219
        %s221 = smul.u32 2, %s14
        %s222 = smul.u32 2, %s14
        %v224 = vld [vmem:[%s1] sm:$0xf]
        %v225 = vld [vmem:[%s1 + $0x4] sm:$0xf]
        %v226 = vld [vmem:[%s201] sm:$0xff]
        %v227 = vld [vmem:[%s201 + $0x8] sm:$0xff]
        %v228 = vld [vmem:[%s201 + $0x10] sm:$0xff]
        %v229 = vld [vmem:[%s201 + $0x18] sm:$0xff]
        %v230 = vld [vmem:[%s201 + $0x20] sm:$0xff]
        %v231 = vld [vmem:[%s201 + $0x28] sm:$0xff]
        %v232 = vld [vmem:[%s2] sm:$0xff]
        %v233 = vld [vmem:[%s2 + $0x8] sm:$0xff]
        %235 = vset.pattern.permute.xlu0 0
        %236 = vperm.xlu0 %235, %v232
        %v237 = vpop.permute.xlu0 %236
        %240 = vset.pattern.permute.xlu0 0
        %241 = vperm.xlu0 %240, %v233
        %v242 = vpop.permute.xlu0 %241
        %v246 = vunpack.c.l.b16 %v224
        %v247 = vunpack.c.l.b16 %v225
        %v248 = vpack.c.b16 %v247, %v246
        %v255 = vunpack.c.l.b16 %v226
        %v256 = vunpack.c.h.b16 %v226
        %v257 = vunpack.c.l.b16 %v227
        %v258 = vunpack.c.h.b16 %v227
        %v259 = vunpack.c.l.b16 %v228
        %v260 = vunpack.c.h.b16 %v228
        %v261 = vunpack.c.l.b16 %v229
        %v262 = vunpack.c.h.b16 %v229
        %v263 = vunpack.c.l.b16 %v230
        %v264 = vunpack.c.h.b16 %v230
        %v265 = vunpack.c.l.b16 %v231
        %v266 = vunpack.c.h.b16 %v231
        %v267 = vpack.c.b16 %v257, %v255
        %v268 = vpack.c.b16 %v258, %v256
        %v269 = vpack.c.b16 %v261, %v259
        %v270 = vpack.c.b16 %v262, %v260
        %v271 = vpack.c.b16 %v265, %v263
        %v272 = vpack.c.b16 %v266, %v264
        %vm279 = vcmask 392192
        %v281 = vsel %vm279, %v248, 0
        %283 = vmatprep.subr.bf16.mxu0 0
        %284 = vmatpush1.bf16.msra.mxu0 0
        %285 = vmatprep.subr.bf16.mxu0 0
        %286 = vmatpush1.bf16.msra.mxu0 0
        %287 = vmatprep.subr.bf16.mxu0 0
        %288 = vmatpush1.bf16.msra.mxu0 0
        %289 = vmatprep.subr.bf16.mxu0 0
        %290 = vmatpush1.bf16.msra.mxu0 0
        %291 = vmatprep.subr.bf16.mxu0 0
        %292 = vmatpush1.bf16.msra.mxu0 0
        %293 = vmatprep.subr.bf16.mxu0 %v272
        %294 = vmatpush1.bf16.msra.mxu0 %v271
        %295 = vmatprep.subr.bf16.mxu0 %v270
        %296 = vmatpush1.bf16.msra.mxu0 %v269
        %297 = vmatprep.subr.bf16.mxu0 %v268
        %298 = vmatpush1.bf16.msra.mxu0 %v267
        %299 = vmatprep.subr.bf16.mxu0 0
        %300 = vmatpush2.bf16.msra.mxu0 0
        %301 = vmatprep.subr.bf16.mxu0 0
        %302 = vmatpush2.bf16.msra.mxu0 0
        %303 = vmatprep.subr.bf16.mxu0 0
        %304 = vmatpush2.bf16.msra.mxu0 0
        %305 = vmatprep.subr.bf16.mxu0 0
        %306 = vmatpush2.bf16.msra.mxu0 0
        %307 = vmatprep.subr.bf16.mxu0 0
        %308 = vmatpush2.bf16.msra.mxu0 0
        %309 = vmatprep.subr.bf16.mxu0 0
        %310 = vmatpush2.bf16.msra.mxu0 0
        %311 = vmatprep.subr.bf16.mxu0 0
        %312 = vmatpush2.bf16.msra.mxu0 0
        %313 = vmatprep.subr.bf16.mxu0 0
        %314 = vmatpush2.bf16.msra.mxu0 0
        %315 = vmatprep.mubr.bf16.mxu0 0
        %316 = vmatmul.mubr.bf16.gmra.mxu0 %v281
        %v317 = vpop.f32.mrf.mxu0
        %v318 = vadd.f32 %v237, %v317
        %v319 = vpop.f32.mrf.mxu0
        %v320 = vadd.f32 %v237, %v319
        %v321 = vpop.f32.mrf.mxu0
        %v322 = vadd.f32 %v242, %v321
        %v323 = vpop.f32.mrf.mxu0
        %v324 = vadd.f32 %v242, %v323
        %325 = vdwg.mxu0
        %v326 = vmax.f32 %v318, 0.0
        %v327 = vmax.f32 %v320, 0.0
        %v328 = vmax.f32 %v322, 0.0
        %v329 = vmax.f32 %v324, 0.0
        %v330 = vpack.c.bf16 %v328, %v326
        %v331 = vpack.c.bf16 %v329, %v327
        %v334 = vunpack.c.l.b16 %v330
        %v335 = vunpack.c.l.b16 %v331
        %v336 = vunpack.c.h.b16 %v330
        %v337 = vunpack.c.h.b16 %v331
        %v338 = vpack.c.b16 %v335, %v334
        %v339 = vpack.c.b16 %v337, %v336
        %342 = vst [vmem:[%s220] sm:$0xff] %v338
        %343 = vst [vmem:[%s220 + $0x8] sm:$0xff] %v339
        %s344 = sand.u32 %s90, 1
        %s345 = sand.u32 %s90, 1
        %s346 = smul.addr %s345, 16
        %s347 = scalar_lea.vmem [#allocation3], %s346
        // Predicated region
        $region71: #{deform_conv_forward.1} parent=65 // pred_check
          %p348 = pneg %p100
        $region72: #{deform_conv_forward.1} parent=65 // pred_check_branch
          %350 = sbr.rel (%p348) target = $region74
        $region73: #{deform_conv_forward.1} parent=65 // pred_region
          %s351 = smul.u32 2, %s14
          %s352 = smul.addr %s351, 4
          %s353 = scalar_lea.vmem %s3, %s352
          // Predicated region
          $region75: #{deform_conv_forward.1} parent=73 // pred_check
            _
          $region76: #{deform_conv_forward.1} parent=73 // pred_check_branch
            %355 = sbr.rel (0) target = $region78
          $region77: #{deform_conv_forward.1} parent=73 // pred_region
            // Predicated region
            $region79: #{deform_conv_forward.1} parent=77 // pred_check
              _
            $region80: #{deform_conv_forward.1} parent=77 // pred_check_branch
              %357 = sbr.rel (0) target = $region82
            $region81: #{deform_conv_forward.1} parent=77 // pred_region
              // Predicated region
              $region94: #{deform_conv_forward.1} parent=81 // pred_check
                _
              $region95: #{deform_conv_forward.1} parent=81 // pred_check_branch
                %375 = sbr.rel (0) target = $region97
              $region96: #{deform_conv_forward.1} parent=81 // pred_region
                loop: start=0, step=1, limit=1
                $region98: #{deform_conv_forward.1} parent=96 // loop_pre_header
                  _
                $region99: #{deform_conv_forward.1} parent=96 // loop_header
                  %s377 = sphi 0, %s381
                  %p378 = scmp.ge.s32.totalorder %s377, 1
                  %s382 = sphi %s347, %s347
                  %s383 = sphi %s353, %s353
                $region100: #{deform_conv_forward.1} parent=96 // loop_header_branch
                  %380 = sbr.rel (%p378) target = $region104
                $region101: #{deform_conv_forward.1} parent=96 // loop_body
                  %v384 = vld [vmem:[%s382] sm:$0xff]
                  %385 = vst [vmem:[%s383] sm:$0xff] %v384
                  %v386 = vld [vmem:[%s382 + $0x8] sm:$0xff]
                  %387 = vst [vmem:[%s383 + $0x10] sm:$0xff] %v386
                $region102: #{deform_conv_forward.1} parent=96 // loop_footer
                  %s381 = sadd.s32 1, %s377
                $region103: #{deform_conv_forward.1} parent=96 // loop_footer_branch
                  %376 = sbr.rel target = $region99
                $region104: #{deform_conv_forward.1} parent=96 // loop_exit
                  _
              $region97: #{deform_conv_forward.1} parent=81 // pred_fallthru
                _
              // Predicated region
              $region105: #{deform_conv_forward.1} parent=81 // pred_check
                _
              $region106: #{deform_conv_forward.1} parent=81 // pred_check_branch
                %389 = sbr.rel target = $region108
              $region107: #{deform_conv_forward.1} parent=81 // pred_region
                _
              $region108: #{deform_conv_forward.1} parent=81 // pred_fallthru
                _
            $region82: #{deform_conv_forward.1} parent=77 // pred_fallthru
              _
            // Predicated region
            $region83: #{deform_conv_forward.1} parent=77 // pred_check
              _
            $region84: #{deform_conv_forward.1} parent=77 // pred_check_branch
              %359 = sbr.rel target = $region86
            $region85: #{deform_conv_forward.1} parent=77 // pred_region
              %s361 = ssub.s32 256, 1
              loop: start=0, step=1, limit=1
              $region87: #{deform_conv_forward.1} parent=85 // loop_pre_header
                _
              $region88: #{deform_conv_forward.1} parent=85 // loop_header
                %s363 = sphi 0, %s367
                %p364 = scmp.ge.s32.totalorder %s363, 1
                %s368 = sphi %s347, %s347
                %s369 = sphi %s353, %s353
              $region89: #{deform_conv_forward.1} parent=85 // loop_header_branch
                %366 = sbr.rel (%p364) target = $region93
              $region90: #{deform_conv_forward.1} parent=85 // loop_body
                %v370 = vld [vmem:[%s368] sm:%s361]
                %371 = vst [vmem:[%s369] sm:%s361] %v370
                %v372 = vld [vmem:[%s368 + $0x8] sm:%s361]
                %373 = vst [vmem:[%s369 + $0x10] sm:%s361] %v372
              $region91: #{deform_conv_forward.1} parent=85 // loop_footer
                %s367 = sadd.s32 1, %s363
              $region92: #{deform_conv_forward.1} parent=85 // loop_footer_branch
                %362 = sbr.rel target = $region88
              $region93: #{deform_conv_forward.1} parent=85 // loop_exit
                _
            $region86: #{deform_conv_forward.1} parent=77 // pred_fallthru
              _
          $region78: #{deform_conv_forward.1} parent=73 // pred_fallthru
            _
          %390 = vnop
        $region74: #{deform_conv_forward.1} parent=65 // pred_fallthru
          _
      $region66: #{deform_conv_forward.1} parent=5 // pred_fallthru
        _
      %p391 = scmp.le.s32.totalorder 2, %s9
      // Predicated region
      $region109: #{deform_conv_forward.1} parent=5 // pred_check
        %p392 = pneg %p391
      $region110: #{deform_conv_forward.1} parent=5 // pred_check_branch
        %394 = sbr.rel (%p392) target = $region112
      $region111: #{deform_conv_forward.1} parent=5 // pred_region
        %s395 = ssub.s32 %s9, 2
        // Predicated region
        $region113: #{deform_conv_forward.1} parent=111 // pred_check
          %p396 = pneg %p106
        $region114: #{deform_conv_forward.1} parent=111 // pred_check_branch
          %398 = sbr.rel (%p396) target = $region116
        $region115: #{deform_conv_forward.1} parent=111 // pred_region
          %s399 = sand.u32 %s91, 1
          %s400 = sand.u32 %s91, 1
          %s401 = smul.addr %s400, 16
          %s402 = scalar_lea.vmem [#allocation3], %s401
        $region116: #{deform_conv_forward.1} parent=111 // pred_fallthru
          _
      $region112: #{deform_conv_forward.1} parent=5 // pred_fallthru
        _
    $region6: #{deform_conv_forward.1} parent=1 // loop_footer
      %s13 = sadd.s32 1, %s9
    $region7: #{deform_conv_forward.1} parent=1 // loop_footer_branch
      %8 = sbr.rel target = $region3
    $region8: #{deform_conv_forward.1} parent=1 // loop_exit
      _

</llo_original>
